<compile_context>
chip_gen: v5e
topology: v5e:2x2
jax: 0.10.0
libtpu: 0.0.40
codegen_flags: <defaults>
</compile_context>

<pallas_src>
import jax
import jax.numpy as jnp
from jax.experimental import pallas as pl
from jax.experimental.pallas import tpu as pltpu


def _round_up(x: int, m: int) -> int:
    return ((x + m - 1) // m) * m


def _make_pooling_net_kernel(c_valid: int):
    """Kernel closure over the static number of valid classes."""

    def kernel(x_ref, w_ref, b_ref, o_ref):
        # x_ref: [TILE_N, H], w_ref: [H, C_PAD], b_ref: [1, C_PAD],
        # o_ref: [TILE_N, C]  (only the valid class lanes go back to HBM).
        # Linear layer on the MXU (f32 accumulation) + lane-dense bias row.
        # Padded class lanes carry a -1e30 bias, so they never win the row max
        # and exp() to 0 in the sum — no explicit mask needed.
        z = jnp.dot(x_ref[...], w_ref[...], preferred_element_type=jnp.float32)
        z = z + b_ref[...]

        # Numerically stable log_softmax along the class dim.
        m = jnp.max(z, axis=1, keepdims=True)
        shifted = z - m
        lse = jnp.log(jnp.sum(jnp.exp(shifted), axis=1, keepdims=True))

        # Store only the valid class lanes (masked vst; avoids the padded-lane
        # HBM writeback and the wrapper-side slice pass).
        o_ref[...] = (shifted - lse)[:, :c_valid].astype(o_ref.dtype)

    return kernel


def pooling_net_forward(x, w, b, *, tile_n=1024):
    """x: [N, H] f32, w: [H, C] f32, b: [C] f32 -> log_softmax(x @ w + b), [N, C] f32."""
    N, H = x.shape
    C = w.shape[1]

    # Lane-dense class dim inside the kernel only.
    C_PAD = _round_up(C, 128)

    # Row tiling.  No wrapper-side padding of x: the last grid block runs
    # ragged (OOB reads are garbage rows whose output rows are discarded).
    tile_n = int(tile_n)
    if N <= tile_n:
        tile_n = _round_up(N, 8)          # single sublane-aligned block
    else:
        # Cap so the parallel row axis has >= ~4 grid steps (v7x 2-TC load
        # balance) while keeping tiles >= 256 rows to amortize per-step
        # overhead.  Irrelevant (but harmless) on v5e/v6e (1 TC).
        tile_n = max(256, min(tile_n, _round_up(pl.cdiv(N, 4), 8)))
    grid = (pl.cdiv(N, tile_n),)

    # Pad weight columns with zeros; fold the padded-lane mask into the bias
    # with a large *finite* negative value (never produces inf-inf NaNs).
    w_p = jnp.pad(w, ((0, 0), (0, C_PAD - C))) if C_PAD != C else w
    b_p = jnp.pad(b, (0, C_PAD - C), constant_values=-1e30).reshape(1, C_PAD)

    cost = pl.CostEstimate(
        flops=2 * N * H * C,
        transcendentals=N * C_PAD,
        bytes_accessed=4 * (N * H + H * C_PAD + N * C),
    )

    return pl.pallas_call(
        _make_pooling_net_kernel(C),
        out_shape=jax.ShapeDtypeStruct((N, C), jnp.float32),
        grid=grid,
        in_specs=[
            pl.BlockSpec((tile_n, H), lambda i: (i, 0)),     # row block of x
            pl.BlockSpec((H, C_PAD), lambda i: (0, 0)),      # full (padded) weight
            pl.BlockSpec((1, C_PAD), lambda i: (0, 0)),      # lane-dense bias row
        ],
        out_specs=pl.BlockSpec((tile_n, C), lambda i: (i, 0)),
        compiler_params=pltpu.CompilerParams(
            dimension_semantics=("parallel",),               # megacore / v7x 2-TC sharding
        ),
        cost_estimate=cost,
    )(x, w_p, b_p)


def reference_forward(x, w, b):
    z = x @ w + b[None, :]
    return jax.nn.log_softmax(z, axis=1)


def _make_params(key, num_hidden, num_classes):
    # PyTorch-style Linear init: uniform(-1/sqrt(H), 1/sqrt(H)); weight as [H, C].
    kw, kb = jax.random.split(key)
    bound = 1.0 / jnp.sqrt(jnp.float32(num_hidden))
    w = jax.random.uniform(kw, (num_hidden, num_classes), dtype=jnp.float32,
                           minval=-bound, maxval=bound)
    b = jax.random.uniform(kb, (num_classes,), dtype=jnp.float32,
                           minval=-bound, maxval=bound)
    return w, b


if __name__ == "__main__":
    key = jax.random.PRNGKey(0)
    kx1, kp1, kx2, kp2, kx3, kp3 = jax.random.split(key, 6)

    # --- Module defaults: num_hidden=32, num_classes=1, N=64 node rows ------
    num_hidden, num_classes, num_nodes = 32, 1, 64
    x = jax.random.normal(kx1, (num_nodes, num_hidden), dtype=jnp.float32)
    w, b = _make_params(kp1, num_hidden, num_classes)

    out = pooling_net_forward(x, w, b)
    out = jax.block_until_ready(out)
    ref = reference_forward(x, w, b)
    assert out.shape == (num_nodes, num_classes)
    # NOTE: with num_classes=1, log_softmax over a single class is exactly 0
    # for every row — matches the PyTorch reference (model-level quirk).
    assert jnp.allclose(out, ref, atol=1e-5, rtol=1e-5)

    # --- Secondary check: multi-class + ragged N (N=100, single ragged block)
    num_classes2, num_nodes2 = 10, 100
    x2 = jax.random.normal(kx2, (num_nodes2, num_hidden), dtype=jnp.float32)
    w2, b2 = _make_params(kp2, num_hidden, num_classes2)

    out2 = pooling_net_forward(x2, w2, b2)
    out2 = jax.block_until_ready(out2)
    ref2 = reference_forward(x2, w2, b2)
    assert out2.shape == (num_nodes2, num_classes2)
    assert jnp.allclose(out2, ref2, atol=1e-5, rtol=1e-5)
    assert jnp.all(jnp.isfinite(out2))

    # --- Tertiary check: multi-step grid with a ragged tail block (N=1300
    #     forces several grid steps plus an OOB-read/discarded-write tail). --
    num_classes3, num_nodes3 = 10, 1300
    x3 = jax.random.normal(kx3, (num_nodes3, num_hidden), dtype=jnp.float32)
    w3, b3 = _make_params(kp3, num_hidden, num_classes3)

    out3 = pooling_net_forward(x3, w3, b3)
    out3 = jax.block_until_ready(out3)
    ref3 = reference_forward(x3, w3, b3)
    assert out3.shape == (num_nodes3, num_classes3)
    assert jnp.allclose(out3, ref3, atol=1e-5, rtol=1e-5)
    assert jnp.all(jnp.isfinite(out3))

    print("KERNEL_OK")
</pallas_src>

<mosaic_0001>
module attributes {stable_mosaic.version = 11 : i64} {
  func.func @kernel(%arg0: i32, %arg1: memref<64x32xf32, #tpu.memory_space<vmem>>, %arg2: memref<32x128xf32, #tpu.memory_space<vmem>>, %arg3: memref<1x128xf32, #tpu.memory_space<vmem>>, %arg4: memref<64x1xf32, #tpu.memory_space<vmem>>) attributes {dimension_semantics = [#tpu.dimension_semantics<parallel>], iteration_bounds = array<i64: 1>, scalar_prefetch = 0 : i64, scratch_operands = 0 : i64, tpu.core_type = #tpu.core_type<tc>, window_params = [{transform_indices = @transform_0, window_bounds = array<i64: 64, 32>}, {pipeline_mode = #tpu.pipeline_mode<synchronous>, transform_indices = @transform_1, window_bounds = array<i64: 32, 128>}, {pipeline_mode = #tpu.pipeline_mode<synchronous>, transform_indices = @transform_2, window_bounds = array<i64: 1, 128>}, {transform_indices = @transform_3, window_bounds = array<i64: 64, 1>}]} {
    %c0 = arith.constant 0 : index
    %c0_0 = arith.constant 0 : index
    %0 = vector.load %arg1[%c0, %c0_0] : memref<64x32xf32, #tpu.memory_space<vmem>>, vector<64x32xf32>
    %c0_1 = arith.constant 0 : index
    %c0_2 = arith.constant 0 : index
    %1 = vector.load %arg2[%c0_1, %c0_2] : memref<32x128xf32, #tpu.memory_space<vmem>>, vector<32x128xf32>
    %cst = arith.constant dense<0.000000e+00> : vector<64x128xf32>
    %2 = tpu.matmul %0, %1, %cst {dimension_numbers = #tpu.dot_dimension_numbers<[1], [0], [0], [1], [0, 0, 1, 1], [], []>} : vector<64x32xf32>, vector<32x128xf32>, vector<64x128xf32> -> vector<64x128xf32>
    %c0_3 = arith.constant 0 : index
    %c0_4 = arith.constant 0 : index
    %3 = vector.load %arg3[%c0_3, %c0_4] : memref<1x128xf32, #tpu.memory_space<vmem>>, vector<1x128xf32>
    %4 = vector.broadcast %3 : vector<1x128xf32> to vector<64x128xf32>
    %5 = arith.addf %2, %4 : vector<64x128xf32>
    %cst_5 = arith.constant dense<0xFF800000> : vector<64xf32>
    %6 = vector.multi_reduction <maximumf>, %5, %cst_5 [1] : vector<64x128xf32> to vector<64xf32>
    %7 = vector.shape_cast %6 : vector<64xf32> to vector<64x1xf32>
    %8 = vector.broadcast %7 : vector<64x1xf32> to vector<64x128xf32>
    %9 = arith.subf %5, %8 : vector<64x128xf32>
    %10 = math.exp %9 : vector<64x128xf32>
    %cst_6 = arith.constant dense<0.000000e+00> : vector<64xf32>
    %11 = vector.multi_reduction <add>, %10, %cst_6 [1] : vector<64x128xf32> to vector<64xf32>
    %12 = vector.shape_cast %11 : vector<64xf32> to vector<64x1xf32>
    %13 = math.log %12 : vector<64x1xf32>
    %14 = vector.broadcast %13 : vector<64x1xf32> to vector<64x128xf32>
    %15 = arith.subf %9, %14 : vector<64x128xf32>
    %16 = vector.extract_strided_slice %15 {offsets = [0, 0], sizes = [64, 1], strides = [1, 1]} : vector<64x128xf32> to vector<64x1xf32>
    %c0_7 = arith.constant 0 : index
    %c0_8 = arith.constant 0 : index
    %17 = vector.load %arg4[%c0_7, %c0_8] : memref<64x1xf32, #tpu.memory_space<vmem>>, vector<64x1xf32>
    tpu.vector_store %arg4[%c0_7, %c0_8], %16 {strides = array<i32>} : memref<64x1xf32, #tpu.memory_space<vmem>>, vector<64x1xf32>,
    return
  }
  func.func @transform_0(%arg0: i32) -> (i32, i32) {
    %c0_i32 = arith.constant 0 : i32
    %c0_i32_0 = arith.constant 0 : i32
    return %arg0, %c0_i32 : i32, i32
  }
  func.func @transform_1(%arg0: i32) -> (i32, i32) {
    %c0_i32 = arith.constant 0 : i32
    %c0_i32_0 = arith.constant 0 : i32
    %c0_i32_1 = arith.constant 0 : i32
    return %c0_i32, %c0_i32_0 : i32, i32
  }
  func.func @transform_2(%arg0: i32) -> (i32, i32) {
    %c0_i32 = arith.constant 0 : i32
    %c0_i32_0 = arith.constant 0 : i32
    %c0_i32_1 = arith.constant 0 : i32
    return %c0_i32, %c0_i32_0 : i32, i32
  }
  func.func @transform_3(%arg0: i32) -> (i32, i32) {
    %c0_i32 = arith.constant 0 : i32
    %c0_i32_0 = arith.constant 0 : i32
    return %arg0, %c0_i32 : i32, i32
  }
}

</mosaic_0001>

<llo_original>
// kernel: tpu_custom_call.1
$region0: #{tpu_custom_call.1}
  #allocation0 [shape = 'u32[]', space=smem, size = 0x4, offset = 0x4, fixed_abs, tag = 'smem constant byte address 0x4 - core index']
  #allocation1 [shape = 'u32[72,128]{1,0:T(1,128)}', space=vmem, size = 0x9000, scoped, tag = 'internal scratch']
  %s0 = inlined_call_operand.vmem [shape: f32[64,32], index: 0, kind: input, shape index: {}]
  %s1 = inlined_call_operand.vmem [shape: f32[32,128], index: 1, kind: input, shape index: {}]
  %s2 = inlined_call_operand.vmem [shape: f32[1,128], index: 2, kind: input, shape index: {}]
  %s3 = inlined_call_operand.vmem [shape: f32[64,1], index: 3, kind: output, shape index: {}]
  %s4 = sld [smem:[#allocation0]]
  $region22: #{tpu_custom_call.1} parent=0
    _
  %s6 = ssub.s32 1, %s4
  %s7 = scalar_select 0, %s6, %s4
  // Predicated region
  $region2: #{tpu_custom_call.1} parent=0 // pred_check
    _
  $region3: #{tpu_custom_call.1} parent=0 // pred_check_branch
    %9 = sbr.rel (0) target = $region5
  $region4: #{tpu_custom_call.1} parent=0 // pred_region
    _
  $region5: #{tpu_custom_call.1} parent=0 // pred_fallthru
    _
  // Predicated region
  $region6: #{tpu_custom_call.1} parent=0 // pred_check
    _
  $region7: #{tpu_custom_call.1} parent=0 // pred_check_branch
    %11 = sbr.rel (0) target = $region9
  $region8: #{tpu_custom_call.1} parent=0 // pred_region
    _
  $region9: #{tpu_custom_call.1} parent=0 // pred_fallthru
    _
  // Predicated region
  $region10: #{tpu_custom_call.1} parent=0 // pred_check
    _
  $region11: #{tpu_custom_call.1} parent=0 // pred_check_branch
    %13 = sbr.rel (0) target = $region13
  $region12: #{tpu_custom_call.1} parent=0 // pred_region
    _
  $region13: #{tpu_custom_call.1} parent=0 // pred_fallthru
    _
  %v14 = vld [vmem:[%s0] sm:$0xff]
  %v15 = vld [vmem:[%s0 + $0x8] sm:$0xff]
  %v16 = vld [vmem:[%s0 + $0x10] sm:$0xff]
  %v17 = vld [vmem:[%s0 + $0x18] sm:$0xff]
  %v18 = vld [vmem:[%s0 + $0x20] sm:$0xff]
  %v19 = vld [vmem:[%s0 + $0x28] sm:$0xff]
  %v20 = vld [vmem:[%s0 + $0x30] sm:$0xff]
  %v21 = vld [vmem:[%s0 + $0x38] sm:$0xff]
  %v22 = vld [vmem:[%s1] sm:$0xff]
  %v23 = vld [vmem:[%s1 + $0x8] sm:$0xff]
  %v24 = vld [vmem:[%s1 + $0x10] sm:$0xff]
  %v25 = vld [vmem:[%s1 + $0x18] sm:$0xff]
  %v26 = vld [vmem:[%s2] sm:$0x1]
  %v28 = vperm.slane %v26, 0
  %vm30 = vcmask 261120
  %v32 = vsel %vm30, %v14, 0
  %v35 = vsel %vm30, %v15, 0
  %v38 = vsel %vm30, %v16, 0
  %v41 = vsel %vm30, %v17, 0
  %v44 = vsel %vm30, %v18, 0
  %v47 = vsel %vm30, %v19, 0
  %v50 = vsel %vm30, %v20, 0
  %v53 = vsel %vm30, %v21, 0
  %55 = vmatpush.msra.mxu0 0.0
  %56 = vmatpush.msra.mxu0 0.0
  %57 = vmatpush.msra.mxu0 0.0
  %58 = vmatpush.msra.mxu0 0.0
  %59 = vmatpush.msra.mxu0 0.0
  %60 = vmatpush.msra.mxu0 0.0
  %61 = vmatpush.msra.mxu0 0.0
  %62 = vmatpush.msra.mxu0 0.0
  %63 = vmatpush.msra.mxu0 0.0
  %64 = vmatpush.msra.mxu0 0.0
  %65 = vmatpush.msra.mxu0 0.0
  %66 = vmatpush.msra.mxu0 0.0
  %67 = vmatpush.msra.mxu0 %v25
  %68 = vmatpush.msra.mxu0 %v24
  %69 = vmatpush.msra.mxu0 %v23
  %70 = vmatpush.msra.mxu0 %v22
  %71 = vmatmul.f32.gmra.mxu0 %v32
  %v72 = vpop.f32.mrf.mxu0
  %v73 = vadd.f32 %v28, %v72
  %74 = vmatmul.f32.gmra.mxu0 %v35
  %v75 = vpop.f32.mrf.mxu0
  %v76 = vadd.f32 %v28, %v75
  %77 = vmatmul.f32.gmra.mxu0 %v38
  %v78 = vpop.f32.mrf.mxu0
  %v79 = vadd.f32 %v28, %v78
  %80 = vmatmul.f32.gmra.mxu0 %v41
  %v81 = vpop.f32.mrf.mxu0
  %v82 = vadd.f32 %v28, %v81
  %83 = vmatmul.f32.gmra.mxu0 %v44
  %v84 = vpop.f32.mrf.mxu0
  %v85 = vadd.f32 %v28, %v84
  %86 = vmatmul.f32.gmra.mxu0 %v47
  %v87 = vpop.f32.mrf.mxu0
  %v88 = vadd.f32 %v28, %v87
  %89 = vmatmul.f32.gmra.mxu0 %v50
  %v90 = vpop.f32.mrf.mxu0
  %v91 = vadd.f32 %v28, %v90
  %92 = vmatmul.f32.gmra.mxu0 %v53
  %v93 = vpop.f32.mrf.mxu0
  %v94 = vadd.f32 %v28, %v93
  %95 = vdwg.mxu0
  %96 = vmax.xlane.f32.xlu0 %v73
  %v97 = vpop.xlane.xlu0 %96
  %98 = vmax.xlane.f32.xlu0 %v76
  %v99 = vpop.xlane.xlu0 %98
  %100 = vmax.xlane.f32.xlu0 %v79
  %v101 = vpop.xlane.xlu0 %100
  %102 = vmax.xlane.f32.xlu0 %v82
  %v103 = vpop.xlane.xlu0 %102
  %104 = vmax.xlane.f32.xlu0 %v85
  %v105 = vpop.xlane.xlu0 %104
  %106 = vmax.xlane.f32.xlu0 %v88
  %v107 = vpop.xlane.xlu0 %106
  %108 = vmax.xlane.f32.xlu0 %v91
  %v109 = vpop.xlane.xlu0 %108
  %110 = vmax.xlane.f32.xlu0 %v94
  %v111 = vpop.xlane.xlu0 %110
  %v112 = vsub.f32 %v73, %v97
  %v113 = vsub.f32 %v76, %v99
  %v114 = vsub.f32 %v79, %v101
  %v115 = vsub.f32 %v82, %v103
  %v116 = vsub.f32 %v85, %v105
  %v117 = vsub.f32 %v88, %v107
  %v118 = vsub.f32 %v91, %v109
  %v119 = vsub.f32 %v94, %v111
  %v120 = vmul.f32 %v112, 1.442695
  %v121 = vpow.pop %v120
  %v122 = vmul.f32 %v113, 1.442695
  %v123 = vpow.pop %v122
  %v124 = vmul.f32 %v114, 1.442695
  %v125 = vpow.pop %v124
  %v126 = vmul.f32 %v115, 1.442695
  %v127 = vpow.pop %v126
  %v128 = vmul.f32 %v116, 1.442695
  %v129 = vpow.pop %v128
  %v130 = vmul.f32 %v117, 1.442695
  %v131 = vpow.pop %v130
  %v132 = vmul.f32 %v118, 1.442695
  %v133 = vpow.pop %v132
  %v134 = vmul.f32 %v119, 1.442695
  %v135 = vpow.pop %v134
  %136 = vadd.xlane.f32.xlu0 %v121
  %v137 = vpop.xlane.xlu0 %136
  %138 = vadd.xlane.f32.xlu0 %v123
  %v139 = vpop.xlane.xlu0 %138
  %140 = vadd.xlane.f32.xlu0 %v125
  %v141 = vpop.xlane.xlu0 %140
  %142 = vadd.xlane.f32.xlu0 %v127
  %v143 = vpop.xlane.xlu0 %142
  %144 = vadd.xlane.f32.xlu0 %v129
  %v145 = vpop.xlane.xlu0 %144
  %146 = vadd.xlane.f32.xlu0 %v131
  %v147 = vpop.xlane.xlu0 %146
  %148 = vadd.xlane.f32.xlu0 %v133
  %v149 = vpop.xlane.xlu0 %148
  %150 = vadd.xlane.f32.xlu0 %v135
  %v151 = vpop.xlane.xlu0 %150
  %v152 = vlog2.pop %v137
  %v153 = vmul.f32 %v152, 0.6931472
  %v154 = vlog2.pop %v139
  %v155 = vmul.f32 %v154, 0.6931472
  %v156 = vlog2.pop %v141
  %v157 = vmul.f32 %v156, 0.6931472
  %v158 = vlog2.pop %v143
  %v159 = vmul.f32 %v158, 0.6931472
  %v160 = vlog2.pop %v145
  %v161 = vmul.f32 %v160, 0.6931472
  %v162 = vlog2.pop %v147
  %v163 = vmul.f32 %v162, 0.6931472
  %v164 = vlog2.pop %v149
  %v165 = vmul.f32 %v164, 0.6931472
  %v166 = vlog2.pop %v151
  %v167 = vmul.f32 %v166, 0.6931472
  %v168 = vsub.f32 %v112, %v153
  %v169 = vsub.f32 %v113, %v155
  %v170 = vsub.f32 %v114, %v157
  %v171 = vsub.f32 %v115, %v159
  %v172 = vsub.f32 %v116, %v161
  %v173 = vsub.f32 %v117, %v163
  %v174 = vsub.f32 %v118, %v165
  %v175 = vsub.f32 %v119, %v167
  %vm176 = vcmask 7168
  %177 = vst.msk [vmem:[%s3] sm:$0xff] %vm176, %v168
  %178 = vst.msk [vmem:[%s3 + $0x8] sm:$0xff] %vm176, %v169
  %179 = vst.msk [vmem:[%s3 + $0x10] sm:$0xff] %vm176, %v170
  %180 = vst.msk [vmem:[%s3 + $0x18] sm:$0xff] %vm176, %v171
  %181 = vst.msk [vmem:[%s3 + $0x20] sm:$0xff] %vm176, %v172
  %182 = vst.msk [vmem:[%s3 + $0x28] sm:$0xff] %vm176, %v173
  %183 = vst.msk [vmem:[%s3 + $0x30] sm:$0xff] %vm176, %v174
  %184 = vst.msk [vmem:[%s3 + $0x38] sm:$0xff] %vm176, %v175
  // Predicated region
  $region14: #{tpu_custom_call.1} parent=0 // pred_check
    _
  $region15: #{tpu_custom_call.1} parent=0 // pred_check_branch
    %186 = sbr.rel (0) target = $region17
  $region16: #{tpu_custom_call.1} parent=0 // pred_region
    _
  $region17: #{tpu_custom_call.1} parent=0 // pred_fallthru
    _
  // Predicated region
  $region18: #{tpu_custom_call.1} parent=0 // pred_check
    _
  $region19: #{tpu_custom_call.1} parent=0 // pred_check_branch
    %188 = sbr.rel (0) target = $region21
  $region20: #{tpu_custom_call.1} parent=0 // pred_region
    _
  $region21: #{tpu_custom_call.1} parent=0 // pred_fallthru
    _

</llo_original>
